<compile_context>
chip_gen: v7x
topology: tpu7x:2x2x1
jax: 0.10.0
libtpu: 0.0.40
codegen_flags: <defaults>
</compile_context>

<pallas_src>
import numpy as np
import jax
import jax.numpy as jnp
from jax.experimental import pallas as pl
from jax.experimental.pallas import tpu as pltpu

NEG_SLOPE = 0.01   # nn.LeakyReLU default negative_slope
P = 128            # padded hidden width (sublane axis of activations)
IN_PAD = 8         # input features padded to one sublane group
OUT_PAD = 8        # output features padded to one sublane group
TB_MAX = 2048      # max batch columns per grid step (multiple of 128)


def _leaky_relu(y):
    # max(y, slope*y) == LeakyReLU(y) for 0 < slope < 1
    return jnp.maximum(y, NEG_SLOPE * y)


def _round_up(n, m):
    return ((n + m - 1) // m) * m


def mlp_kernel(x_ref, w0_ref, b0_ref, wm_ref, bm_ref, wl_ref, bl_ref, o_ref):
    """Feature-major fused MLP.

    x_ref : [IN_PAD, TB]  bf16  input tile (features x batch)
    w0_ref: [P, IN_PAD]   bf16  W0^T  (hidden x input, zero-padded)
    b0_ref: [P, 1]        f32
    wm_ref: [L, P, P]     bf16  hidden W^T stack
    bm_ref: [L, P, 1]     f32
    wl_ref: [OUT_PAD, P]  bf16  W_last^T (output x hidden, zero-padded)
    bl_ref: [OUT_PAD, 1]  f32
    o_ref : [OUT_PAD, TB] f32
    """
    h = jnp.dot(w0_ref[...], x_ref[...],
                preferred_element_type=jnp.float32) + b0_ref[...]
    h = _leaky_relu(h)                                   # [P, TB] f32
    for l in range(wm_ref.shape[0]):                     # static unroll, small L
        y = jnp.dot(wm_ref[l], h.astype(wm_ref.dtype),
                    preferred_element_type=jnp.float32) + bm_ref[l]
        h = _leaky_relu(y)
    out = jnp.dot(wl_ref[...], h.astype(wl_ref.dtype),
                  preferred_element_type=jnp.float32) + bl_ref[...]
    o_ref[...] = out.astype(o_ref.dtype)                 # [OUT_PAD, TB] lane-dense


def make_mlp_forward(num_hidden_layers):
    if num_hidden_layers < 1:
        raise ValueError("packing assumes >=1 hidden->hidden layer")

    @jax.jit
    def mlp_forward(x_fm, w0_t, b0_p, wm_t, bm_p, wl_t, bl_p):
        _, b_pad = x_fm.shape                 # static under jit
        tb = min(TB_MAX, b_pad)               # host padding makes b_pad % tb == 0
        grid = (b_pad // tb,)
        L = wm_t.shape[0]
        return pl.pallas_call(
            mlp_kernel,
            out_shape=jax.ShapeDtypeStruct((OUT_PAD, b_pad), jnp.float32),
            grid_spec=pltpu.PrefetchScalarGridSpec(
                num_scalar_prefetch=0,
                grid=grid,
                in_specs=[
                    pl.BlockSpec((IN_PAD, tb), lambda i: (0, i)),    # x tile
                    pl.BlockSpec((P, IN_PAD), lambda i: (0, 0)),     # W0^T
                    pl.BlockSpec((P, 1), lambda i: (0, 0)),          # b0
                    pl.BlockSpec((L, P, P), lambda i: (0, 0, 0)),    # mid W^T
                    pl.BlockSpec((L, P, 1), lambda i: (0, 0, 0)),    # mid b
                    pl.BlockSpec((OUT_PAD, P), lambda i: (0, 0)),    # W_last^T
                    pl.BlockSpec((OUT_PAD, 1), lambda i: (0, 0)),    # b_last
                ],
                out_specs=pl.BlockSpec((OUT_PAD, tb), lambda i: (0, i)),
            ),
            compiler_params=pltpu.CompilerParams(
                dimension_semantics=("parallel",)),      # both v7x TCs
        )(x_fm, w0_t, b0_p, wm_t, bm_p, wl_t, bl_p)

    return mlp_forward


def init_params(key, input_size, hidden, num_hidden_layers, output_size):
    """PyTorch nn.Linear-style U(-1/sqrt(fan_in), 1/sqrt(fan_in)) init.

    Returns (packed feature-major kernel operands, raw f32 layer list).
    """
    dims = [input_size] + [hidden] * (num_hidden_layers + 1) + [output_size]
    n_layers = len(dims) - 1
    keys = jax.random.split(key, n_layers)

    raw = []
    for l in range(n_layers):
        fan_in, fan_out = dims[l], dims[l + 1]
        k_w, k_b = jax.random.split(keys[l])
        bound = 1.0 / np.sqrt(fan_in)
        W = np.asarray(jax.random.uniform(k_w, (fan_in, fan_out),
                                          jnp.float32, -bound, bound))
        b = np.asarray(jax.random.uniform(k_b, (fan_out,),
                                          jnp.float32, -bound, bound))
        raw.append((W, b))

    w0_t = np.zeros((P, IN_PAD), np.float32)
    b0_p = np.zeros((P, 1), np.float32)
    w0_t[:hidden, :input_size] = raw[0][0].T
    b0_p[:hidden, 0] = raw[0][1]

    L = num_hidden_layers
    wm_t = np.zeros((L, P, P), np.float32)
    bm_p = np.zeros((L, P, 1), np.float32)
    for l in range(L):
        W, b = raw[1 + l]
        wm_t[l, :hidden, :hidden] = W.T
        bm_p[l, :hidden, 0] = b

    wl_t = np.zeros((OUT_PAD, P), np.float32)
    bl_p = np.zeros((OUT_PAD, 1), np.float32)
    W, b = raw[-1]
    wl_t[:output_size, :hidden] = W.T
    bl_p[:output_size, 0] = b

    packed = (jnp.asarray(w0_t, jnp.bfloat16), jnp.asarray(b0_p, jnp.float32),
              jnp.asarray(wm_t, jnp.bfloat16), jnp.asarray(bm_p, jnp.float32),
              jnp.asarray(wl_t, jnp.bfloat16), jnp.asarray(bl_p, jnp.float32))
    return packed, raw


def reference_fm(x_fm, w0_t, b0_p, wm_t, bm_p, wl_t, bl_p):
    """Pure-JAX reference with identical bf16/f32 numerics (feature-major)."""
    h = jnp.dot(w0_t, x_fm, preferred_element_type=jnp.float32) + b0_p
    h = _leaky_relu(h)
    for l in range(wm_t.shape[0]):
        y = jnp.dot(wm_t[l], h.astype(wm_t.dtype),
                    preferred_element_type=jnp.float32) + bm_p[l]
        h = _leaky_relu(y)
    return jnp.dot(wl_t, h.astype(wl_t.dtype),
                   preferred_element_type=jnp.float32) + bl_p


def reference_f32(x_valid, raw_layers):
    """Full-precision f32 reference of the original PyTorch Net forward."""
    h = x_valid.astype(np.float32)
    n = len(raw_layers)
    for i, (W, b) in enumerate(raw_layers):
        y = h @ W + b
        h = np.maximum(y, NEG_SLOPE * y) if i < n - 1 else y
    return h


if __name__ == "__main__":
    input_size = 4
    hidden_layer_width = 32
    num_hidden_layers = 2
    output_size = 2
    batch = 16

    key = jax.random.PRNGKey(0)
    k_x, k_p = jax.random.split(key)

    # Raw points (scaled so a good fraction survives the L1-ball filter).
    x_raw = 0.3 * jax.random.normal(k_x, (batch, input_size), jnp.float32)

    # Host-side preprocessing from the app script (data-dependent row count
    # stays on the host): keep rows with L1 norm <= 1.8.
    x_np = np.asarray(x_raw)
    norms = np.linalg.norm(x_np, ord=1, axis=1)
    inside_sphere = norms <= 1.8
    x_valid = x_np[inside_sphere]
    n_valid = x_valid.shape[0]

    # Static lane-aligned padded batch derived from `batch` (not n_valid), so
    # the kernel shape never changes across calls -> no recompiles.
    if batch <= TB_MAX:
        B_pad = _round_up(batch, 128)
    else:
        B_pad = _round_up(batch, TB_MAX)

    # Feature-major packing: [IN_PAD, B_pad] bf16, features on sublanes,
    # batch on lanes; padding rows/columns are zero.
    x_fm_np = np.zeros((IN_PAD, B_pad), np.float32)
    x_fm_np[:input_size, :n_valid] = x_valid.T
    x_fm = jnp.asarray(x_fm_np, jnp.bfloat16)

    packed, raw_layers = init_params(k_p, input_size, hidden_layer_width,
                                     num_hidden_layers, output_size)

    mlp_forward = make_mlp_forward(num_hidden_layers)
    out_fm = jax.block_until_ready(mlp_forward(x_fm, *packed))

    # Slice back to the valid rows / true output width outside the kernel.
    out = np.asarray(out_fm)[:output_size, :n_valid].T          # [n_valid, 2]

    # Check 1: reference with identical bf16 quantization (tight tolerance).
    ref = np.asarray(reference_fm(x_fm, *packed))[:output_size, :n_valid].T
    np.testing.assert_allclose(out, ref, rtol=1e-3, atol=1e-3)

    # Check 2: full-precision f32 reference of the original Net (loose
    # tolerance absorbs the deliberate bf16 weight/activation quantization).
    ref32 = reference_f32(x_valid, raw_layers)
    np.testing.assert_allclose(out, ref32, rtol=5e-2, atol=5e-2)

    print("KERNEL_OK")
</pallas_src>

<mosaic_0001>
module attributes {stable_mosaic.version = 11 : i64} {
  func.func @mlp_kernel(%arg0: i32, %arg1: memref<8x128xbf16, #tpu.memory_space<vmem>>, %arg2: memref<128x8xbf16, #tpu.memory_space<vmem>>, %arg3: memref<128x1xf32, #tpu.memory_space<vmem>>, %arg4: memref<2x128x128xbf16, #tpu.memory_space<vmem>>, %arg5: memref<2x128x1xf32, #tpu.memory_space<vmem>>, %arg6: memref<8x128xbf16, #tpu.memory_space<vmem>>, %arg7: memref<8x1xf32, #tpu.memory_space<vmem>>, %arg8: memref<8x128xf32, #tpu.memory_space<vmem>>) attributes {dimension_semantics = [#tpu.dimension_semantics<parallel>], iteration_bounds = array<i64: 1>, scalar_prefetch = 0 : i64, scratch_operands = 0 : i64, tpu.core_type = #tpu.core_type<tc>, window_params = [{transform_indices = @transform_0, window_bounds = array<i64: 8, 128>}, {pipeline_mode = #tpu.pipeline_mode<synchronous>, transform_indices = @transform_1, window_bounds = array<i64: 128, 8>}, {pipeline_mode = #tpu.pipeline_mode<synchronous>, transform_indices = @transform_2, window_bounds = array<i64: 128, 1>}, {pipeline_mode = #tpu.pipeline_mode<synchronous>, transform_indices = @transform_3, window_bounds = array<i64: 2, 128, 128>}, {pipeline_mode = #tpu.pipeline_mode<synchronous>, transform_indices = @transform_4, window_bounds = array<i64: 2, 128, 1>}, {pipeline_mode = #tpu.pipeline_mode<synchronous>, transform_indices = @transform_5, window_bounds = array<i64: 8, 128>}, {pipeline_mode = #tpu.pipeline_mode<synchronous>, transform_indices = @transform_6, window_bounds = array<i64: 8, 1>}, {transform_indices = @transform_7, window_bounds = array<i64: 8, 128>}]} {
    %c0 = arith.constant 0 : index
    %c0_0 = arith.constant 0 : index
    %0 = vector.load %arg2[%c0, %c0_0] : memref<128x8xbf16, #tpu.memory_space<vmem>>, vector<128x8xbf16>
    %c0_1 = arith.constant 0 : index
    %c0_2 = arith.constant 0 : index
    %1 = vector.load %arg1[%c0_1, %c0_2] : memref<8x128xbf16, #tpu.memory_space<vmem>>, vector<8x128xbf16>
    %cst = arith.constant dense<0.000000e+00> : vector<128x128xf32>
    %2 = tpu.matmul %0, %1, %cst {dimension_numbers = #tpu.dot_dimension_numbers<[1], [0], [0], [1], [0, 0, 1, 1], [], []>} : vector<128x8xbf16>, vector<8x128xbf16>, vector<128x128xf32> -> vector<128x128xf32>
    %c0_3 = arith.constant 0 : index
    %c0_4 = arith.constant 0 : index
    %3 = vector.load %arg3[%c0_3, %c0_4] : memref<128x1xf32, #tpu.memory_space<vmem>>, vector<128x1xf32>
    %4 = vector.broadcast %3 : vector<128x1xf32> to vector<128x128xf32>
    %5 = arith.addf %2, %4 : vector<128x128xf32>
    %cst_5 = arith.constant 0.00999999977 : f32
    %6 = vector.broadcast %cst_5 : f32 to vector<128x128xf32>
    %7 = arith.mulf %6, %5 : vector<128x128xf32>
    %8 = arith.maximumf %5, %7 : vector<128x128xf32>
    %c0_6 = arith.constant 0 : index
    %c0_7 = arith.constant 0 : index
    %c0_8 = arith.constant 0 : index
    %9 = vector.load %arg4[%c0_6, %c0_7, %c0_8] : memref<2x128x128xbf16, #tpu.memory_space<vmem>>, vector<1x128x128xbf16>
    %10 = vector.shape_cast %9 : vector<1x128x128xbf16> to vector<128x128xbf16>
    %11 = arith.truncf %8 : vector<128x128xf32> to vector<128x128xbf16>
    %cst_9 = arith.constant dense<0.000000e+00> : vector<128x128xf32>
    %12 = tpu.matmul %10, %11, %cst_9 {dimension_numbers = #tpu.dot_dimension_numbers<[1], [0], [0], [1], [0, 0, 1, 1], [], []>} : vector<128x128xbf16>, vector<128x128xbf16>, vector<128x128xf32> -> vector<128x128xf32>
    %c0_10 = arith.constant 0 : index
    %c0_11 = arith.constant 0 : index
    %c0_12 = arith.constant 0 : index
    %13 = vector.load %arg5[%c0_10, %c0_11, %c0_12] : memref<2x128x1xf32, #tpu.memory_space<vmem>>, vector<1x128x1xf32>
    %14 = vector.shape_cast %13 : vector<1x128x1xf32> to vector<128x1xf32>
    %15 = vector.broadcast %14 : vector<128x1xf32> to vector<128x128xf32>
    %16 = arith.addf %12, %15 : vector<128x128xf32>
    %cst_13 = arith.constant 0.00999999977 : f32
    %17 = vector.broadcast %cst_13 : f32 to vector<128x128xf32>
    %18 = arith.mulf %17, %16 : vector<128x128xf32>
    %19 = arith.maximumf %16, %18 : vector<128x128xf32>
    %c1 = arith.constant 1 : index
    %c0_14 = arith.constant 0 : index
    %c0_15 = arith.constant 0 : index
    %20 = vector.load %arg4[%c1, %c0_14, %c0_15] : memref<2x128x128xbf16, #tpu.memory_space<vmem>>, vector<1x128x128xbf16>
    %21 = vector.shape_cast %20 : vector<1x128x128xbf16> to vector<128x128xbf16>
    %22 = arith.truncf %19 : vector<128x128xf32> to vector<128x128xbf16>
    %cst_16 = arith.constant dense<0.000000e+00> : vector<128x128xf32>
    %23 = tpu.matmul %21, %22, %cst_16 {dimension_numbers = #tpu.dot_dimension_numbers<[1], [0], [0], [1], [0, 0, 1, 1], [], []>} : vector<128x128xbf16>, vector<128x128xbf16>, vector<128x128xf32> -> vector<128x128xf32>
    %c1_17 = arith.constant 1 : index
    %c0_18 = arith.constant 0 : index
    %c0_19 = arith.constant 0 : index
    %24 = vector.load %arg5[%c1_17, %c0_18, %c0_19] : memref<2x128x1xf32, #tpu.memory_space<vmem>>, vector<1x128x1xf32>
    %25 = vector.shape_cast %24 : vector<1x128x1xf32> to vector<128x1xf32>
    %26 = vector.broadcast %25 : vector<128x1xf32> to vector<128x128xf32>
    %27 = arith.addf %23, %26 : vector<128x128xf32>
    %cst_20 = arith.constant 0.00999999977 : f32
    %28 = vector.broadcast %cst_20 : f32 to vector<128x128xf32>
    %29 = arith.mulf %28, %27 : vector<128x128xf32>
    %30 = arith.maximumf %27, %29 : vector<128x128xf32>
    %c0_21 = arith.constant 0 : index
    %c0_22 = arith.constant 0 : index
    %31 = vector.load %arg6[%c0_21, %c0_22] : memref<8x128xbf16, #tpu.memory_space<vmem>>, vector<8x128xbf16>
    %32 = arith.truncf %30 : vector<128x128xf32> to vector<128x128xbf16>
    %cst_23 = arith.constant dense<0.000000e+00> : vector<8x128xf32>
    %33 = tpu.matmul %31, %32, %cst_23 {dimension_numbers = #tpu.dot_dimension_numbers<[1], [0], [0], [1], [0, 0, 1, 1], [], []>} : vector<8x128xbf16>, vector<128x128xbf16>, vector<8x128xf32> -> vector<8x128xf32>
    %c0_24 = arith.constant 0 : index
    %c0_25 = arith.constant 0 : index
    %34 = vector.load %arg7[%c0_24, %c0_25] : memref<8x1xf32, #tpu.memory_space<vmem>>, vector<8x1xf32>
    %35 = vector.broadcast %34 : vector<8x1xf32> to vector<8x128xf32>
    %36 = arith.addf %33, %35 : vector<8x128xf32>
    %c0_26 = arith.constant 0 : index
    %c0_27 = arith.constant 0 : index
    %37 = vector.load %arg8[%c0_26, %c0_27] : memref<8x128xf32, #tpu.memory_space<vmem>>, vector<8x128xf32>
    tpu.vector_store %arg8[%c0_26, %c0_27], %36 {strides = array<i32>} : memref<8x128xf32, #tpu.memory_space<vmem>>, vector<8x128xf32>,
    return
  }
  func.func @transform_0(%arg0: i32) -> (i32, i32) {
    %c0_i32 = arith.constant 0 : i32
    %c0_i32_0 = arith.constant 0 : i32
    return %c0_i32, %arg0 : i32, i32
  }
  func.func @transform_1(%arg0: i32) -> (i32, i32) {
    %c0_i32 = arith.constant 0 : i32
    %c0_i32_0 = arith.constant 0 : i32
    %c0_i32_1 = arith.constant 0 : i32
    return %c0_i32, %c0_i32_0 : i32, i32
  }
  func.func @transform_2(%arg0: i32) -> (i32, i32) {
    %c0_i32 = arith.constant 0 : i32
    %c0_i32_0 = arith.constant 0 : i32
    %c0_i32_1 = arith.constant 0 : i32
    return %c0_i32, %c0_i32_0 : i32, i32
  }
  func.func @transform_3(%arg0: i32) -> (i32, i32, i32) {
    %c0_i32 = arith.constant 0 : i32
    %c0_i32_0 = arith.constant 0 : i32
    %c0_i32_1 = arith.constant 0 : i32
    %c0_i32_2 = arith.constant 0 : i32
    return %c0_i32, %c0_i32_0, %c0_i32_1 : i32, i32, i32
  }
  func.func @transform_4(%arg0: i32) -> (i32, i32, i32) {
    %c0_i32 = arith.constant 0 : i32
    %c0_i32_0 = arith.constant 0 : i32
    %c0_i32_1 = arith.constant 0 : i32
    %c0_i32_2 = arith.constant 0 : i32
    return %c0_i32, %c0_i32_0, %c0_i32_1 : i32, i32, i32
  }
  func.func @transform_5(%arg0: i32) -> (i32, i32) {
    %c0_i32 = arith.constant 0 : i32
    %c0_i32_0 = arith.constant 0 : i32
    %c0_i32_1 = arith.constant 0 : i32
    return %c0_i32, %c0_i32_0 : i32, i32
  }
  func.func @transform_6(%arg0: i32) -> (i32, i32) {
    %c0_i32 = arith.constant 0 : i32
    %c0_i32_0 = arith.constant 0 : i32
    %c0_i32_1 = arith.constant 0 : i32
    return %c0_i32, %c0_i32_0 : i32, i32
  }
  func.func @transform_7(%arg0: i32) -> (i32, i32) {
    %c0_i32 = arith.constant 0 : i32
    %c0_i32_0 = arith.constant 0 : i32
    return %c0_i32, %arg0 : i32, i32
  }
}

</mosaic_0001>

<llo_original>
// kernel: mlp_forward.1
$region0: #{mlp_forward.1}
  #allocation0 [shape = 'u32[]', space=smem, size = 0x4, offset = 0x4, fixed_abs, tag = 'smem constant byte address 0x4 - core index']
  #allocation1 [shape = 'u32[144,128]{1,0:T(1,128)}', space=vmem, size = 0x12000, scoped, tag = 'internal scratch']
  %s0 = inlined_call_operand.vmem [shape: bf16[8,128], index: 0, kind: input, shape index: {}]
  %s1 = inlined_call_operand.vmem [shape: bf16[128,8], index: 1, kind: input, shape index: {}]
  %s2 = inlined_call_operand.vmem [shape: f32[128,1], index: 2, kind: input, shape index: {}]
  %s3 = inlined_call_operand.vmem [shape: bf16[2,128,128], index: 3, kind: input, shape index: {}]
  %s4 = inlined_call_operand.vmem [shape: f32[2,128,1], index: 4, kind: input, shape index: {}]
  %s5 = inlined_call_operand.vmem [shape: bf16[8,128], index: 5, kind: input, shape index: {}]
  %s6 = inlined_call_operand.vmem [shape: f32[8,1], index: 6, kind: input, shape index: {}]
  %s7 = inlined_call_operand.hbm [shape: f32[8,128], index: 7, kind: output, shape index: {}]
  %s8 = sld [smem:[#allocation0]]
  $region38: #{mlp_forward.1} parent=0
    _
  %s10 = ssub.s32 1, %s8
  %s11 = scalar_select 0, %s10, %s8
  $region1: #{mlp_forward.1} parent=0
    #allocation2 [shape = 'u8[4096]{0}', space=vmem, size = 0x1000, scoped, tag = 'output window, operand 0, single buffered']
    #allocation3 [shape = 's32[1]{0}', space=sflag, size = 0x4, scoped, tag = 'scoped memory for mlp_forward.1']
    %12 = vsyncpa [#allocation3], 0
    // Predicated region
    $region2: #{mlp_forward.1} parent=1 // pred_check
      _
    $region3: #{mlp_forward.1} parent=1 // pred_check_branch
      %14 = sbr.rel (0) target = $region5
    $region4: #{mlp_forward.1} parent=1 // pred_region
      _
    $region5: #{mlp_forward.1} parent=1 // pred_fallthru
      _
    // Predicated region
    $region6: #{mlp_forward.1} parent=1 // pred_check
      _
    $region7: #{mlp_forward.1} parent=1 // pred_check_branch
      %16 = sbr.rel (0) target = $region9
    $region8: #{mlp_forward.1} parent=1 // pred_region
      _
    $region9: #{mlp_forward.1} parent=1 // pred_fallthru
      _
    // Predicated region
    $region10: #{mlp_forward.1} parent=1 // pred_check
      _
    $region11: #{mlp_forward.1} parent=1 // pred_check_branch
      %18 = sbr.rel (0) target = $region13
    $region12: #{mlp_forward.1} parent=1 // pred_region
      _
    $region13: #{mlp_forward.1} parent=1 // pred_fallthru
      _
    // Predicated region
    $region14: #{mlp_forward.1} parent=1 // pred_check
      _
    $region15: #{mlp_forward.1} parent=1 // pred_check_branch
      %20 = sbr.rel (0) target = $region17
    $region16: #{mlp_forward.1} parent=1 // pred_region
      _
    $region17: #{mlp_forward.1} parent=1 // pred_fallthru
      _
    // Predicated region
    $region18: #{mlp_forward.1} parent=1 // pred_check
      _
    $region19: #{mlp_forward.1} parent=1 // pred_check_branch
      %22 = sbr.rel (0) target = $region21
    $region20: #{mlp_forward.1} parent=1 // pred_region
      _
    $region21: #{mlp_forward.1} parent=1 // pred_fallthru
      _
    // Predicated region
    $region22: #{mlp_forward.1} parent=1 // pred_check
      _
    $region23: #{mlp_forward.1} parent=1 // pred_check_branch
      %24 = sbr.rel (0) target = $region25
    $region24: #{mlp_forward.1} parent=1 // pred_region
      _
    $region25: #{mlp_forward.1} parent=1 // pred_fallthru
      _
    // Predicated region
    $region26: #{mlp_forward.1} parent=1 // pred_check
      _
    $region27: #{mlp_forward.1} parent=1 // pred_check_branch
      %26 = sbr.rel (0) target = $region29
    $region28: #{mlp_forward.1} parent=1 // pred_region
      _
    $region29: #{mlp_forward.1} parent=1 // pred_fallthru
      _
    %v28 = vld [vmem:[%s1] sm:$0xf]
    %v29 = vld [vmem:[%s1 + $0x4] sm:$0xf]
    %v30 = vld [vmem:[%s1 + $0x8] sm:$0xf]
    %v31 = vld [vmem:[%s1 + $0xc] sm:$0xf]
    %v32 = vld [vmem:[%s1 + $0x10] sm:$0xf]
    %v33 = vld [vmem:[%s1 + $0x14] sm:$0xf]
    %v34 = vld [vmem:[%s1 + $0x18] sm:$0xf]
    %v35 = vld [vmem:[%s1 + $0x1c] sm:$0xf]
    %v36 = vld [vmem:[%s1 + $0x20] sm:$0xf]
    %v37 = vld [vmem:[%s1 + $0x24] sm:$0xf]
    %v38 = vld [vmem:[%s1 + $0x28] sm:$0xf]
    %v39 = vld [vmem:[%s1 + $0x2c] sm:$0xf]
    %v40 = vld [vmem:[%s1 + $0x30] sm:$0xf]
    %v41 = vld [vmem:[%s1 + $0x34] sm:$0xf]
    %v42 = vld [vmem:[%s1 + $0x38] sm:$0xf]
    %v43 = vld [vmem:[%s1 + $0x3c] sm:$0xf]
    %v44 = vld [vmem:[%s0] sm:$0xf]
    %v45 = vld [vmem:[%s2] sm:$0xff]
    %v46 = vld [vmem:[%s2 + $0x8] sm:$0xff]
    %v47 = vld [vmem:[%s2 + $0x10] sm:$0xff]
    %v48 = vld [vmem:[%s2 + $0x18] sm:$0xff]
    %v49 = vld [vmem:[%s2 + $0x20] sm:$0xff]
    %v50 = vld [vmem:[%s2 + $0x28] sm:$0xff]
    %v51 = vld [vmem:[%s2 + $0x30] sm:$0xff]
    %v52 = vld [vmem:[%s2 + $0x38] sm:$0xff]
    %v53 = vld [vmem:[%s2 + $0x40] sm:$0xff]
    %v54 = vld [vmem:[%s2 + $0x48] sm:$0xff]
    %v55 = vld [vmem:[%s2 + $0x50] sm:$0xff]
    %v56 = vld [vmem:[%s2 + $0x58] sm:$0xff]
    %v57 = vld [vmem:[%s2 + $0x60] sm:$0xff]
    %v58 = vld [vmem:[%s2 + $0x68] sm:$0xff]
    %v59 = vld [vmem:[%s2 + $0x70] sm:$0xff]
    %v60 = vld [vmem:[%s2 + $0x78] sm:$0xff]
    %62 = vset.pattern.permute.xlu0 0
    %63 = vperm.xlu0 %62, %v45
    %v64 = vpop.permute.xlu0 %63
    %67 = vset.pattern.permute.xlu0 0
    %68 = vperm.xlu0 %67, %v46
    %v69 = vpop.permute.xlu0 %68
    %72 = vset.pattern.permute.xlu0 0
    %73 = vperm.xlu0 %72, %v47
    %v74 = vpop.permute.xlu0 %73
    %77 = vset.pattern.permute.xlu0 0
    %78 = vperm.xlu0 %77, %v48
    %v79 = vpop.permute.xlu0 %78
    %82 = vset.pattern.permute.xlu0 0
    %83 = vperm.xlu0 %82, %v49
    %v84 = vpop.permute.xlu0 %83
    %87 = vset.pattern.permute.xlu0 0
    %88 = vperm.xlu0 %87, %v50
    %v89 = vpop.permute.xlu0 %88
    %92 = vset.pattern.permute.xlu0 0
    %93 = vperm.xlu0 %92, %v51
    %v94 = vpop.permute.xlu0 %93
    %97 = vset.pattern.permute.xlu0 0
    %98 = vperm.xlu0 %97, %v52
    %v99 = vpop.permute.xlu0 %98
    %102 = vset.pattern.permute.xlu0 0
    %103 = vperm.xlu0 %102, %v53
    %v104 = vpop.permute.xlu0 %103
    %107 = vset.pattern.permute.xlu0 0
    %108 = vperm.xlu0 %107, %v54
    %v109 = vpop.permute.xlu0 %108
    %112 = vset.pattern.permute.xlu0 0
    %113 = vperm.xlu0 %112, %v55
    %v114 = vpop.permute.xlu0 %113
    %117 = vset.pattern.permute.xlu0 0
    %118 = vperm.xlu0 %117, %v56
    %v119 = vpop.permute.xlu0 %118
    %122 = vset.pattern.permute.xlu0 0
    %123 = vperm.xlu0 %122, %v57
    %v124 = vpop.permute.xlu0 %123
    %127 = vset.pattern.permute.xlu0 0
    %128 = vperm.xlu0 %127, %v58
    %v129 = vpop.permute.xlu0 %128
    %132 = vset.pattern.permute.xlu0 0
    %133 = vperm.xlu0 %132, %v59
    %v134 = vpop.permute.xlu0 %133
    %137 = vset.pattern.permute.xlu0 0
    %138 = vperm.xlu0 %137, %v60
    %v139 = vpop.permute.xlu0 %138
    %v157 = vunpack.c.l.b16 %v28
    %v158 = vunpack.c.l.b16 %v29
    %v159 = vunpack.c.l.b16 %v30
    %v160 = vunpack.c.l.b16 %v31
    %v161 = vunpack.c.l.b16 %v32
    %v162 = vunpack.c.l.b16 %v33
    %v163 = vunpack.c.l.b16 %v34
    %v164 = vunpack.c.l.b16 %v35
    %v165 = vunpack.c.l.b16 %v36
    %v166 = vunpack.c.l.b16 %v37
    %v167 = vunpack.c.l.b16 %v38
    %v168 = vunpack.c.l.b16 %v39
    %v169 = vunpack.c.l.b16 %v40
    %v170 = vunpack.c.l.b16 %v41
    %v171 = vunpack.c.l.b16 %v42
    %v172 = vunpack.c.l.b16 %v43
    %v173 = vpack.c.b16 %v158, %v157
    %v174 = vpack.c.b16 %v160, %v159
    %v175 = vpack.c.b16 %v162, %v161
    %v176 = vpack.c.b16 %v164, %v163
    %v177 = vpack.c.b16 %v166, %v165
    %v178 = vpack.c.b16 %v168, %v167
    %v179 = vpack.c.b16 %v170, %v169
    %v180 = vpack.c.b16 %v172, %v171
    %vm181 = vcmask 64512
    %v183 = vsel %vm181, %v173, 0
    %v186 = vsel %vm181, %v174, 0
    %v189 = vsel %vm181, %v175, 0
    %v192 = vsel %vm181, %v176, 0
    %v195 = vsel %vm181, %v177, 0
    %v198 = vsel %vm181, %v178, 0
    %v201 = vsel %vm181, %v179, 0
    %v204 = vsel %vm181, %v180, 0
    %vm206 = vcmask 1043456
    %v208 = vsel %vm206, %v44, 0
    %210 = vmatprep.subr.bf16.mxu0 0
    %211 = vmatpush1.bf16.msra.mxu0 %v208
    %212 = vmatprep.subr.bf16.mxu0 0
    %213 = vmatpush1.bf16.msra.mxu0 0
    %214 = vmatprep.subr.bf16.mxu0 0
    %215 = vmatpush1.bf16.msra.mxu0 0
    %216 = vmatprep.subr.bf16.mxu0 0
    %217 = vmatpush1.bf16.msra.mxu0 0
    %218 = vmatprep.subr.bf16.mxu0 0
    %219 = vmatpush1.bf16.msra.mxu0 0
    %220 = vmatprep.subr.bf16.mxu0 0
    %221 = vmatpush1.bf16.msra.mxu0 0
    %222 = vmatprep.subr.bf16.mxu0 0
    %223 = vmatpush1.bf16.msra.mxu0 0
    %224 = vmatprep.subr.bf16.mxu0 0
    %225 = vmatpush1.bf16.msra.mxu0 0
    %226 = vmatprep.subr.bf16.mxu0 0
    %227 = vmatpush1.bf16.msra.mxu0 0
    %228 = vmatprep.subr.bf16.mxu0 0
    %229 = vmatpush1.bf16.msra.mxu0 0
    %230 = vmatprep.subr.bf16.mxu0 0
    %231 = vmatpush1.bf16.msra.mxu0 0
    %232 = vmatprep.subr.bf16.mxu0 0
    %233 = vmatpush1.bf16.msra.mxu0 0
    %234 = vmatprep.subr.bf16.mxu0 0
    %235 = vmatpush1.bf16.msra.mxu0 0
    %236 = vmatprep.subr.bf16.mxu0 0
    %237 = vmatpush1.bf16.msra.mxu0 0
    %238 = vmatprep.subr.bf16.mxu0 0
    %239 = vmatpush1.bf16.msra.mxu0 0
    %240 = vmatprep.subr.bf16.mxu0 0
    %241 = vmatpush1.bf16.msra.mxu0 0
    %242 = vmatprep.mubr.bf16.mxu0 0
    %243 = vmatmul.mubr.bf16.gmra.mrb[0].mxu0 %v183
    %v244 = vpop.f32.mrb[0].mxu0
    %v245 = vadd.f32 %v64, %v244
    %v246 = vpop.f32.mrb[0].mxu0
    %v247 = vpop.f32.mrb[0].mxu0
    %v248 = vadd.f32 %v69, %v247
    %v249 = vpop.f32.mrb[0].mxu0
    %250 = vmatprep.mubr.bf16.mxu0 0
    %251 = vmatmul.mubr.bf16.gmra.mrb[0].mxu0 %v186
    %v252 = vpop.f32.mrb[0].mxu0
    %v253 = vadd.f32 %v74, %v252
    %v254 = vpop.f32.mrb[0].mxu0
    %v255 = vpop.f32.mrb[0].mxu0
    %v256 = vadd.f32 %v79, %v255
    %v257 = vpop.f32.mrb[0].mxu0
    %258 = vmatprep.mubr.bf16.mxu0 0
    %259 = vmatmul.mubr.bf16.gmra.mrb[0].mxu0 %v189
    %v260 = vpop.f32.mrb[0].mxu0
    %v261 = vadd.f32 %v84, %v260
    %v262 = vpop.f32.mrb[0].mxu0
    %v263 = vpop.f32.mrb[0].mxu0
    %v264 = vadd.f32 %v89, %v263
    %v265 = vpop.f32.mrb[0].mxu0
    %266 = vmatprep.mubr.bf16.mxu0 0
    %267 = vmatmul.mubr.bf16.gmra.mrb[0].mxu0 %v192
    %v268 = vpop.f32.mrb[0].mxu0
    %v269 = vadd.f32 %v94, %v268
    %v270 = vpop.f32.mrb[0].mxu0
    %v271 = vpop.f32.mrb[0].mxu0
    %v272 = vadd.f32 %v99, %v271
    %v273 = vpop.f32.mrb[0].mxu0
    %274 = vmatprep.mubr.bf16.mxu0 0
    %275 = vmatmul.mubr.bf16.gmra.mrb[0].mxu0 %v195
    %v276 = vpop.f32.mrb[0].mxu0
    %v277 = vadd.f32 %v104, %v276
    %v278 = vpop.f32.mrb[0].mxu0
    %v279 = vpop.f32.mrb[0].mxu0
    %v280 = vadd.f32 %v109, %v279
    %v281 = vpop.f32.mrb[0].mxu0
    %282 = vmatprep.mubr.bf16.mxu0 0
    %283 = vmatmul.mubr.bf16.gmra.mrb[0].mxu0 %v198
    %v284 = vpop.f32.mrb[0].mxu0
    %v285 = vadd.f32 %v114, %v284
    %v286 = vpop.f32.mrb[0].mxu0
    %v287 = vpop.f32.mrb[0].mxu0
    %v288 = vadd.f32 %v119, %v287
    %v289 = vpop.f32.mrb[0].mxu0
    %290 = vmatprep.mubr.bf16.mxu0 0
    %291 = vmatmul.mubr.bf16.gmra.mrb[0].mxu0 %v201
    %v292 = vpop.f32.mrb[0].mxu0
    %v293 = vadd.f32 %v124, %v292
    %v294 = vpop.f32.mrb[0].mxu0
    %v295 = vpop.f32.mrb[0].mxu0
    %v296 = vadd.f32 %v129, %v295
    %v297 = vpop.f32.mrb[0].mxu0
    %298 = vmatprep.mubr.bf16.mxu0 0
    %299 = vmatmul.mubr.bf16.gmra.mrb[0].mxu0 %v204
    %v300 = vpop.f32.mrb[0].mxu0
    %v301 = vadd.f32 %v134, %v300
    %v302 = vpop.f32.mrb[0].mxu0
    %v303 = vpop.f32.mrb[0].mxu0
    %v304 = vadd.f32 %v139, %v303
    %v305 = vpop.f32.mrb[0].mxu0
    %306 = vdwg.mxu0
    %v307 = vmul.f32 %v245, 0.01
    %v308 = vmul.f32 %v248, 0.01
    %v309 = vmul.f32 %v253, 0.01
    %v310 = vmul.f32 %v256, 0.01
    %v311 = vmul.f32 %v261, 0.01
    %v312 = vmul.f32 %v264, 0.01
    %v313 = vmul.f32 %v269, 0.01
    %v314 = vmul.f32 %v272, 0.01
    %v315 = vmul.f32 %v277, 0.01
    %v316 = vmul.f32 %v280, 0.01
    %v317 = vmul.f32 %v285, 0.01
    %v318 = vmul.f32 %v288, 0.01
    %v319 = vmul.f32 %v293, 0.01
    %v320 = vmul.f32 %v296, 0.01
    %v321 = vmul.f32 %v301, 0.01
    %v322 = vmul.f32 %v304, 0.01
    %v323 = vmax.f32 %v245, %v307
    %v324 = vmax.f32 %v248, %v308
    %v325 = vmax.f32 %v253, %v309
    %v326 = vmax.f32 %v256, %v310
    %v327 = vmax.f32 %v261, %v311
    %v328 = vmax.f32 %v264, %v312
    %v329 = vmax.f32 %v269, %v313
    %v330 = vmax.f32 %v272, %v314
    %v331 = vmax.f32 %v277, %v315
    %v332 = vmax.f32 %v280, %v316
    %v333 = vmax.f32 %v285, %v317
    %v334 = vmax.f32 %v288, %v318
    %v335 = vmax.f32 %v293, %v319
    %v336 = vmax.f32 %v296, %v320
    %v337 = vmax.f32 %v301, %v321
    %v338 = vmax.f32 %v304, %v322
    %v339 = vld [vmem:[%s3] sm:$0xf]
    %v340 = vld [vmem:[%s3 + $0x4] sm:$0xf]
    %v341 = vld [vmem:[%s3 + $0x8] sm:$0xf]
    %v342 = vld [vmem:[%s3 + $0xc] sm:$0xf]
    %v343 = vld [vmem:[%s3 + $0x10] sm:$0xf]
    %v344 = vld [vmem:[%s3 + $0x14] sm:$0xf]
    %v345 = vld [vmem:[%s3 + $0x18] sm:$0xf]
    %v346 = vld [vmem:[%s3 + $0x1c] sm:$0xf]
    %v347 = vld [vmem:[%s3 + $0x20] sm:$0xf]
    %v348 = vld [vmem:[%s3 + $0x24] sm:$0xf]
    %v349 = vld [vmem:[%s3 + $0x28] sm:$0xf]
    %v350 = vld [vmem:[%s3 + $0x2c] sm:$0xf]
    %v351 = vld [vmem:[%s3 + $0x30] sm:$0xf]
    %v352 = vld [vmem:[%s3 + $0x34] sm:$0xf]
    %v353 = vld [vmem:[%s3 + $0x38] sm:$0xf]
    %v354 = vld [vmem:[%s3 + $0x3c] sm:$0xf]
    %v355 = vpack.c.bf16 %v324, %v323
    %v356 = vpack.c.bf16 %v326, %v325
    %v357 = vpack.c.bf16 %v328, %v327
    %v358 = vpack.c.bf16 %v330, %v329
    %v359 = vpack.c.bf16 %v332, %v331
    %v360 = vpack.c.bf16 %v334, %v333
    %v361 = vpack.c.bf16 %v336, %v335
    %v362 = vpack.c.bf16 %v338, %v337
    %v363 = vld [vmem:[%s4] sm:$0xff]
    %v364 = vld [vmem:[%s4 + $0x8] sm:$0xff]
    %v365 = vld [vmem:[%s4 + $0x10] sm:$0xff]
    %v366 = vld [vmem:[%s4 + $0x18] sm:$0xff]
    %v367 = vld [vmem:[%s4 + $0x20] sm:$0xff]
    %v368 = vld [vmem:[%s4 + $0x28] sm:$0xff]
    %v369 = vld [vmem:[%s4 + $0x30] sm:$0xff]
    %v370 = vld [vmem:[%s4 + $0x38] sm:$0xff]
    %v371 = vld [vmem:[%s4 + $0x40] sm:$0xff]
    %v372 = vld [vmem:[%s4 + $0x48] sm:$0xff]
    %v373 = vld [vmem:[%s4 + $0x50] sm:$0xff]
    %v374 = vld [vmem:[%s4 + $0x58] sm:$0xff]
    %v375 = vld [vmem:[%s4 + $0x60] sm:$0xff]
    %v376 = vld [vmem:[%s4 + $0x68] sm:$0xff]
    %v377 = vld [vmem:[%s4 + $0x70] sm:$0xff]
    %v378 = vld [vmem:[%s4 + $0x78] sm:$0xff]
    %380 = vset.pattern.permute.xlu0 0
    %381 = vperm.xlu0 %380, %v363
    %v382 = vpop.permute.xlu0 %381
    %385 = vset.pattern.permute.xlu0 0
    %386 = vperm.xlu0 %385, %v364
    %v387 = vpop.permute.xlu0 %386
    %390 = vset.pattern.permute.xlu0 0
    %391 = vperm.xlu0 %390, %v365
    %v392 = vpop.permute.xlu0 %391
    %395 = vset.pattern.permute.xlu0 0
    %396 = vperm.xlu0 %395, %v366
    %v397 = vpop.permute.xlu0 %396
    %400 = vset.pattern.permute.xlu0 0
    %401 = vperm.xlu0 %400, %v367
    %v402 = vpop.permute.xlu0 %401
    %405 = vset.pattern.permute.xlu0 0
    %406 = vperm.xlu0 %405, %v368
    %v407 = vpop.permute.xlu0 %406
    %410 = vset.pattern.permute.xlu0 0
    %411 = vperm.xlu0 %410, %v369
    %v412 = vpop.permute.xlu0 %411
    %415 = vset.pattern.permute.xlu0 0
    %416 = vperm.xlu0 %415, %v370
    %v417 = vpop.permute.xlu0 %416
    %420 = vset.pattern.permute.xlu0 0
    %421 = vperm.xlu0 %420, %v371
    %v422 = vpop.permute.xlu0 %421
    %425 = vset.pattern.permute.xlu0 0
    %426 = vperm.xlu0 %425, %v372
    %v427 = vpop.permute.xlu0 %426
    %430 = vset.pattern.permute.xlu0 0
    %431 = vperm.xlu0 %430, %v373
    %v432 = vpop.permute.xlu0 %431
    %435 = vset.pattern.permute.xlu0 0
    %436 = vperm.xlu0 %435, %v374
    %v437 = vpop.permute.xlu0 %436
    %440 = vset.pattern.permute.xlu0 0
    %441 = vperm.xlu0 %440, %v375
    %v442 = vpop.permute.xlu0 %441
    %445 = vset.pattern.permute.xlu0 0
    %446 = vperm.xlu0 %445, %v376
    %v447 = vpop.permute.xlu0 %446
    %450 = vset.pattern.permute.xlu0 0
    %451 = vperm.xlu0 %450, %v377
    %v452 = vpop.permute.xlu0 %451
    %455 = vset.pattern.permute.xlu0 0
    %456 = vperm.xlu0 %455, %v378
    %v457 = vpop.permute.xlu0 %456
    %v475 = vunpack.c.l.b16 %v339
    %v476 = vunpack.c.l.b16 %v340
    %v477 = vunpack.c.l.b16 %v341
    %v478 = vunpack.c.l.b16 %v342
    %v479 = vunpack.c.l.b16 %v343
    %v480 = vunpack.c.l.b16 %v344
    %v481 = vunpack.c.l.b16 %v345
    %v482 = vunpack.c.l.b16 %v346
    %v483 = vunpack.c.l.b16 %v347
    %v484 = vunpack.c.l.b16 %v348
    %v485 = vunpack.c.l.b16 %v349
    %v486 = vunpack.c.l.b16 %v350
    %v487 = vunpack.c.l.b16 %v351
    %v488 = vunpack.c.l.b16 %v352
    %v489 = vunpack.c.l.b16 %v353
    %v490 = vunpack.c.l.b16 %v354
    %v491 = vpack.c.b16 %v476, %v475
    %v492 = vpack.c.b16 %v478, %v477
    %v493 = vpack.c.b16 %v480, %v479
    %v494 = vpack.c.b16 %v482, %v481
    %v495 = vpack.c.b16 %v484, %v483
    %v496 = vpack.c.b16 %v486, %v485
    %v497 = vpack.c.b16 %v488, %v487
    %v498 = vpack.c.b16 %v490, %v489
    %507 = vmatprep.subr.bf16.mxu0 0
    %508 = vmatpush1.bf16.msra.mxu0 %v355
    %509 = vmatprep.subr.bf16.mxu0 0
    %510 = vmatpush1.bf16.msra.mxu0 %v356
    %511 = vmatprep.subr.bf16.mxu0 0
    %512 = vmatpush1.bf16.msra.mxu0 %v357
    %513 = vmatprep.subr.bf16.mxu0 0
    %514 = vmatpush1.bf16.msra.mxu0 %v358
    %515 = vmatprep.subr.bf16.mxu0 0
    %516 = vmatpush1.bf16.msra.mxu0 %v359
    %517 = vmatprep.subr.bf16.mxu0 0
    %518 = vmatpush1.bf16.msra.mxu0 %v360
    %519 = vmatprep.subr.bf16.mxu0 0
    %520 = vmatpush1.bf16.msra.mxu0 %v361
    %521 = vmatprep.subr.bf16.mxu0 0
    %522 = vmatpush1.bf16.msra.mxu0 %v362
    %523 = vmatprep.subr.bf16.mxu0 0
    %524 = vmatpush1.bf16.msra.mxu0 0
    %525 = vmatprep.subr.bf16.mxu0 0
    %526 = vmatpush1.bf16.msra.mxu0 0
    %527 = vmatprep.subr.bf16.mxu0 0
    %528 = vmatpush1.bf16.msra.mxu0 0
    %529 = vmatprep.subr.bf16.mxu0 0
    %530 = vmatpush1.bf16.msra.mxu0 0
    %531 = vmatprep.subr.bf16.mxu0 0
    %532 = vmatpush1.bf16.msra.mxu0 0
    %533 = vmatprep.subr.bf16.mxu0 0
    %534 = vmatpush1.bf16.msra.mxu0 0
    %535 = vmatprep.subr.bf16.mxu0 0
    %536 = vmatpush1.bf16.msra.mxu0 0
    %537 = vmatprep.subr.bf16.mxu0 0
    %538 = vmatpush1.bf16.msra.mxu0 0
    %539 = vmatprep.mubr.bf16.mxu0 0
    %540 = vmatmul.mubr.bf16.gmra.mrb[0].mxu0 %v491
    %v541 = vpop.f32.mrb[0].mxu0
    %v542 = vadd.f32 %v382, %v541
    %v543 = vpop.f32.mrb[0].mxu0
    %v544 = vpop.f32.mrb[0].mxu0
    %v545 = vadd.f32 %v387, %v544
    %v546 = vpop.f32.mrb[0].mxu0
    %547 = vmatprep.mubr.bf16.mxu0 0
    %548 = vmatmul.mubr.bf16.gmra.mrb[0].mxu0 %v492
    %v549 = vpop.f32.mrb[0].mxu0
    %v550 = vadd.f32 %v392, %v549
    %v551 = vpop.f32.mrb[0].mxu0
    %v552 = vpop.f32.mrb[0].mxu0
    %v553 = vadd.f32 %v397, %v552
    %v554 = vpop.f32.mrb[0].mxu0
    %555 = vmatprep.mubr.bf16.mxu0 0
    %556 = vmatmul.mubr.bf16.gmra.mrb[0].mxu0 %v493
    %v557 = vpop.f32.mrb[0].mxu0
    %v558 = vadd.f32 %v402, %v557
    %v559 = vpop.f32.mrb[0].mxu0
    %v560 = vpop.f32.mrb[0].mxu0
    %v561 = vadd.f32 %v407, %v560
    %v562 = vpop.f32.mrb[0].mxu0
    %563 = vmatprep.mubr.bf16.mxu0 0
    %564 = vmatmul.mubr.bf16.gmra.mrb[0].mxu0 %v494
    %v565 = vpop.f32.mrb[0].mxu0
    %v566 = vadd.f32 %v412, %v565
    %v567 = vpop.f32.mrb[0].mxu0
    %v568 = vpop.f32.mrb[0].mxu0
    %v569 = vadd.f32 %v417, %v568
    %v570 = vpop.f32.mrb[0].mxu0
    %571 = vmatprep.mubr.bf16.mxu0 0
    %572 = vmatmul.mubr.bf16.gmra.mrb[0].mxu0 %v495
    %v573 = vpop.f32.mrb[0].mxu0
    %v574 = vadd.f32 %v422, %v573
    %v575 = vpop.f32.mrb[0].mxu0
    %v576 = vpop.f32.mrb[0].mxu0
    %v577 = vadd.f32 %v427, %v576
    %v578 = vpop.f32.mrb[0].mxu0
    %579 = vmatprep.mubr.bf16.mxu0 0
    %580 = vmatmul.mubr.bf16.gmra.mrb[0].mxu0 %v496
    %v581 = vpop.f32.mrb[0].mxu0
    %v582 = vadd.f32 %v432, %v581
    %v583 = vpop.f32.mrb[0].mxu0
    %v584 = vpop.f32.mrb[0].mxu0
    %v585 = vadd.f32 %v437, %v584
    %v586 = vpop.f32.mrb[0].mxu0
    %587 = vmatprep.mubr.bf16.mxu0 0
    %588 = vmatmul.mubr.bf16.gmra.mrb[0].mxu0 %v497
    %v589 = vpop.f32.mrb[0].mxu0
    %v590 = vadd.f32 %v442, %v589
    %v591 = vpop.f32.mrb[0].mxu0
    %v592 = vpop.f32.mrb[0].mxu0
    %v593 = vadd.f32 %v447, %v592
    %v594 = vpop.f32.mrb[0].mxu0
    %595 = vmatprep.mubr.bf16.mxu0 0
    %596 = vmatmul.mubr.bf16.gmra.mrb[0].mxu0 %v498
    %v597 = vpop.f32.mrb[0].mxu0
    %v598 = vadd.f32 %v452, %v597
    %v599 = vpop.f32.mrb[0].mxu0
    %v600 = vpop.f32.mrb[0].mxu0
    %v601 = vadd.f32 %v457, %v600
    %v602 = vpop.f32.mrb[0].mxu0
    %603 = vdwg.mxu0
    %v604 = vmul.f32 %v542, 0.01
    %v605 = vmul.f32 %v545, 0.01
    %v606 = vmul.f32 %v550, 0.01
    %v607 = vmul.f32 %v553, 0.01
    %v608 = vmul.f32 %v558, 0.01
    %v609 = vmul.f32 %v561, 0.01
    %v610 = vmul.f32 %v566, 0.01
    %v611 = vmul.f32 %v569, 0.01
    %v612 = vmul.f32 %v574, 0.01
    %v613 = vmul.f32 %v577, 0.01
    %v614 = vmul.f32 %v582, 0.01
    %v615 = vmul.f32 %v585, 0.01
    %v616 = vmul.f32 %v590, 0.01
    %v617 = vmul.f32 %v593, 0.01
    %v618 = vmul.f32 %v598, 0.01
    %v619 = vmul.f32 %v601, 0.01
    %v620 = vmax.f32 %v542, %v604
    %v621 = vmax.f32 %v545, %v605
    %v622 = vmax.f32 %v550, %v606
    %v623 = vmax.f32 %v553, %v607
    %v624 = vmax.f32 %v558, %v608
    %v625 = vmax.f32 %v561, %v609
    %v626 = vmax.f32 %v566, %v610
    %v627 = vmax.f32 %v569, %v611
    %v628 = vmax.f32 %v574, %v612
    %v629 = vmax.f32 %v577, %v613
    %v630 = vmax.f32 %v582, %v614
    %v631 = vmax.f32 %v585, %v615
    %v632 = vmax.f32 %v590, %v616
    %v633 = vmax.f32 %v593, %v617
    %v634 = vmax.f32 %v598, %v618
    %v635 = vmax.f32 %v601, %v619
    %s636 = scalar_lea.vmem %s3, 64
    %v637 = vld [vmem:[%s636] sm:$0xf]
    %v638 = vld [vmem:[%s636 + $0x4] sm:$0xf]
    %v639 = vld [vmem:[%s636 + $0x8] sm:$0xf]
    %v640 = vld [vmem:[%s636 + $0xc] sm:$0xf]
    %v641 = vld [vmem:[%s636 + $0x10] sm:$0xf]
    %v642 = vld [vmem:[%s636 + $0x14] sm:$0xf]
    %v643 = vld [vmem:[%s636 + $0x18] sm:$0xf]
    %v644 = vld [vmem:[%s636 + $0x1c] sm:$0xf]
    %v645 = vld [vmem:[%s636 + $0x20] sm:$0xf]
    %v646 = vld [vmem:[%s636 + $0x24] sm:$0xf]
    %v647 = vld [vmem:[%s636 + $0x28] sm:$0xf]
    %v648 = vld [vmem:[%s636 + $0x2c] sm:$0xf]
    %v649 = vld [vmem:[%s636 + $0x30] sm:$0xf]
    %v650 = vld [vmem:[%s636 + $0x34] sm:$0xf]
    %v651 = vld [vmem:[%s636 + $0x38] sm:$0xf]
    %v652 = vld [vmem:[%s636 + $0x3c] sm:$0xf]
    %v653 = vpack.c.bf16 %v621, %v620
    %v654 = vpack.c.bf16 %v623, %v622
    %v655 = vpack.c.bf16 %v625, %v624
    %v656 = vpack.c.bf16 %v627, %v626
    %v657 = vpack.c.bf16 %v629, %v628
    %v658 = vpack.c.bf16 %v631, %v630
    %v659 = vpack.c.bf16 %v633, %v632
    %v660 = vpack.c.bf16 %v635, %v634
    %s661 = scalar_lea.vmem %s4, 128
    %v662 = vld [vmem:[%s661] sm:$0xff]
    %v663 = vld [vmem:[%s661 + $0x8] sm:$0xff]
    %v664 = vld [vmem:[%s661 + $0x10] sm:$0xff]
    %v665 = vld [vmem:[%s661 + $0x18] sm:$0xff]
    %v666 = vld [vmem:[%s661 + $0x20] sm:$0xff]
    %v667 = vld [vmem:[%s661 + $0x28] sm:$0xff]
    %v668 = vld [vmem:[%s661 + $0x30] sm:$0xff]
    %v669 = vld [vmem:[%s661 + $0x38] sm:$0xff]
    %v670 = vld [vmem:[%s661 + $0x40] sm:$0xff]
    %v671 = vld [vmem:[%s661 + $0x48] sm:$0xff]
    %v672 = vld [vmem:[%s661 + $0x50] sm:$0xff]
    %v673 = vld [vmem:[%s661 + $0x58] sm:$0xff]
    %v674 = vld [vmem:[%s661 + $0x60] sm:$0xff]
    %v675 = vld [vmem:[%s661 + $0x68] sm:$0xff]
    %v676 = vld [vmem:[%s661 + $0x70] sm:$0xff]
    %v677 = vld [vmem:[%s661 + $0x78] sm:$0xff]
    %679 = vset.pattern.permute.xlu0 0
    %680 = vperm.xlu0 %679, %v662
    %v681 = vpop.permute.xlu0 %680
    %684 = vset.pattern.permute.xlu0 0
    %685 = vperm.xlu0 %684, %v663
    %v686 = vpop.permute.xlu0 %685
    %689 = vset.pattern.permute.xlu0 0
    %690 = vperm.xlu0 %689, %v664
    %v691 = vpop.permute.xlu0 %690
    %694 = vset.pattern.permute.xlu0 0
    %695 = vperm.xlu0 %694, %v665
    %v696 = vpop.permute.xlu0 %695
    %699 = vset.pattern.permute.xlu0 0
    %700 = vperm.xlu0 %699, %v666
    %v701 = vpop.permute.xlu0 %700
    %704 = vset.pattern.permute.xlu0 0
    %705 = vperm.xlu0 %704, %v667
    %v706 = vpop.permute.xlu0 %705
    %709 = vset.pattern.permute.xlu0 0
    %710 = vperm.xlu0 %709, %v668
    %v711 = vpop.permute.xlu0 %710
    %714 = vset.pattern.permute.xlu0 0
    %715 = vperm.xlu0 %714, %v669
    %v716 = vpop.permute.xlu0 %715
    %719 = vset.pattern.permute.xlu0 0
    %720 = vperm.xlu0 %719, %v670
    %v721 = vpop.permute.xlu0 %720
    %724 = vset.pattern.permute.xlu0 0
    %725 = vperm.xlu0 %724, %v671
    %v726 = vpop.permute.xlu0 %725
    %729 = vset.pattern.permute.xlu0 0
    %730 = vperm.xlu0 %729, %v672
    %v731 = vpop.permute.xlu0 %730
    %734 = vset.pattern.permute.xlu0 0
    %735 = vperm.xlu0 %734, %v673
    %v736 = vpop.permute.xlu0 %735
    %739 = vset.pattern.permute.xlu0 0
    %740 = vperm.xlu0 %739, %v674
    %v741 = vpop.permute.xlu0 %740
    %744 = vset.pattern.permute.xlu0 0
    %745 = vperm.xlu0 %744, %v675
    %v746 = vpop.permute.xlu0 %745
    %749 = vset.pattern.permute.xlu0 0
    %750 = vperm.xlu0 %749, %v676
    %v751 = vpop.permute.xlu0 %750
    %754 = vset.pattern.permute.xlu0 0
    %755 = vperm.xlu0 %754, %v677
    %v756 = vpop.permute.xlu0 %755
    %v774 = vunpack.c.l.b16 %v637
    %v775 = vunpack.c.l.b16 %v638
    %v776 = vunpack.c.l.b16 %v639
    %v777 = vunpack.c.l.b16 %v640
    %v778 = vunpack.c.l.b16 %v641
    %v779 = vunpack.c.l.b16 %v642
    %v780 = vunpack.c.l.b16 %v643
    %v781 = vunpack.c.l.b16 %v644
    %v782 = vunpack.c.l.b16 %v645
    %v783 = vunpack.c.l.b16 %v646
    %v784 = vunpack.c.l.b16 %v647
    %v785 = vunpack.c.l.b16 %v648
    %v786 = vunpack.c.l.b16 %v649
    %v787 = vunpack.c.l.b16 %v650
    %v788 = vunpack.c.l.b16 %v651
    %v789 = vunpack.c.l.b16 %v652
    %v790 = vpack.c.b16 %v775, %v774
    %v791 = vpack.c.b16 %v777, %v776
    %v792 = vpack.c.b16 %v779, %v778
    %v793 = vpack.c.b16 %v781, %v780
    %v794 = vpack.c.b16 %v783, %v782
    %v795 = vpack.c.b16 %v785, %v784
    %v796 = vpack.c.b16 %v787, %v786
    %v797 = vpack.c.b16 %v789, %v788
    %806 = vmatprep.subr.bf16.mxu0 0
    %807 = vmatpush1.bf16.msra.mxu0 %v653
    %808 = vmatprep.subr.bf16.mxu0 0
    %809 = vmatpush1.bf16.msra.mxu0 %v654
    %810 = vmatprep.subr.bf16.mxu0 0
    %811 = vmatpush1.bf16.msra.mxu0 %v655
    %812 = vmatprep.subr.bf16.mxu0 0
    %813 = vmatpush1.bf16.msra.mxu0 %v656
    %814 = vmatprep.subr.bf16.mxu0 0
    %815 = vmatpush1.bf16.msra.mxu0 %v657
    %816 = vmatprep.subr.bf16.mxu0 0
    %817 = vmatpush1.bf16.msra.mxu0 %v658
    %818 = vmatprep.subr.bf16.mxu0 0
    %819 = vmatpush1.bf16.msra.mxu0 %v659
    %820 = vmatprep.subr.bf16.mxu0 0
    %821 = vmatpush1.bf16.msra.mxu0 %v660
    %822 = vmatprep.subr.bf16.mxu0 0
    %823 = vmatpush1.bf16.msra.mxu0 0
    %824 = vmatprep.subr.bf16.mxu0 0
    %825 = vmatpush1.bf16.msra.mxu0 0
    %826 = vmatprep.subr.bf16.mxu0 0
    %827 = vmatpush1.bf16.msra.mxu0 0
    %828 = vmatprep.subr.bf16.mxu0 0
    %829 = vmatpush1.bf16.msra.mxu0 0
    %830 = vmatprep.subr.bf16.mxu0 0
    %831 = vmatpush1.bf16.msra.mxu0 0
    %832 = vmatprep.subr.bf16.mxu0 0
    %833 = vmatpush1.bf16.msra.mxu0 0
    %834 = vmatprep.subr.bf16.mxu0 0
    %835 = vmatpush1.bf16.msra.mxu0 0
    %836 = vmatprep.subr.bf16.mxu0 0
    %837 = vmatpush1.bf16.msra.mxu0 0
    %838 = vmatprep.mubr.bf16.mxu0 0
    %839 = vmatmul.mubr.bf16.gmra.mrb[0].mxu0 %v790
    %v840 = vpop.f32.mrb[0].mxu0
    %v841 = vadd.f32 %v681, %v840
    %v842 = vpop.f32.mrb[0].mxu0
    %v843 = vpop.f32.mrb[0].mxu0
    %v844 = vadd.f32 %v686, %v843
    %v845 = vpop.f32.mrb[0].mxu0
    %846 = vmatprep.mubr.bf16.mxu0 0
    %847 = vmatmul.mubr.bf16.gmra.mrb[0].mxu0 %v791
    %v848 = vpop.f32.mrb[0].mxu0
    %v849 = vadd.f32 %v691, %v848
    %v850 = vpop.f32.mrb[0].mxu0
    %v851 = vpop.f32.mrb[0].mxu0
    %v852 = vadd.f32 %v696, %v851
    %v853 = vpop.f32.mrb[0].mxu0
    %854 = vmatprep.mubr.bf16.mxu0 0
    %855 = vmatmul.mubr.bf16.gmra.mrb[0].mxu0 %v792
    %v856 = vpop.f32.mrb[0].mxu0
    %v857 = vadd.f32 %v701, %v856
    %v858 = vpop.f32.mrb[0].mxu0
    %v859 = vpop.f32.mrb[0].mxu0
    %v860 = vadd.f32 %v706, %v859
    %v861 = vpop.f32.mrb[0].mxu0
    %862 = vmatprep.mubr.bf16.mxu0 0
    %863 = vmatmul.mubr.bf16.gmra.mrb[0].mxu0 %v793
    %v864 = vpop.f32.mrb[0].mxu0
    %v865 = vadd.f32 %v711, %v864
    %v866 = vpop.f32.mrb[0].mxu0
    %v867 = vpop.f32.mrb[0].mxu0
    %v868 = vadd.f32 %v716, %v867
    %v869 = vpop.f32.mrb[0].mxu0
    %870 = vmatprep.mubr.bf16.mxu0 0
    %871 = vmatmul.mubr.bf16.gmra.mrb[0].mxu0 %v794
    %v872 = vpop.f32.mrb[0].mxu0
    %v873 = vadd.f32 %v721, %v872
    %v874 = vpop.f32.mrb[0].mxu0
    %v875 = vpop.f32.mrb[0].mxu0
    %v876 = vadd.f32 %v726, %v875
    %v877 = vpop.f32.mrb[0].mxu0
    %878 = vmatprep.mubr.bf16.mxu0 0
    %879 = vmatmul.mubr.bf16.gmra.mrb[0].mxu0 %v795
    %v880 = vpop.f32.mrb[0].mxu0
    %v881 = vadd.f32 %v731, %v880
    %v882 = vpop.f32.mrb[0].mxu0
    %v883 = vpop.f32.mrb[0].mxu0
    %v884 = vadd.f32 %v736, %v883
    %v885 = vpop.f32.mrb[0].mxu0
    %886 = vmatprep.mubr.bf16.mxu0 0
    %887 = vmatmul.mubr.bf16.gmra.mrb[0].mxu0 %v796
    %v888 = vpop.f32.mrb[0].mxu0
    %v889 = vadd.f32 %v741, %v888
    %v890 = vpop.f32.mrb[0].mxu0
    %v891 = vpop.f32.mrb[0].mxu0
    %v892 = vadd.f32 %v746, %v891
    %v893 = vpop.f32.mrb[0].mxu0
    %894 = vmatprep.mubr.bf16.mxu0 0
    %895 = vmatmul.mubr.bf16.gmra.mrb[0].mxu0 %v797
    %v896 = vpop.f32.mrb[0].mxu0
    %v897 = vadd.f32 %v751, %v896
    %v898 = vpop.f32.mrb[0].mxu0
    %v899 = vpop.f32.mrb[0].mxu0
    %v900 = vadd.f32 %v756, %v899
    %v901 = vpop.f32.mrb[0].mxu0
    %902 = vdwg.mxu0
    %v903 = vmul.f32 %v841, 0.01
    %v904 = vmul.f32 %v844, 0.01
    %v905 = vmul.f32 %v849, 0.01
    %v906 = vmul.f32 %v852, 0.01
    %v907 = vmul.f32 %v857, 0.01
    %v908 = vmul.f32 %v860, 0.01
    %v909 = vmul.f32 %v865, 0.01
    %v910 = vmul.f32 %v868, 0.01
    %v911 = vmul.f32 %v873, 0.01
    %v912 = vmul.f32 %v876, 0.01
    %v913 = vmul.f32 %v881, 0.01
    %v914 = vmul.f32 %v884, 0.01
    %v915 = vmul.f32 %v889, 0.01
    %v916 = vmul.f32 %v892, 0.01
    %v917 = vmul.f32 %v897, 0.01
    %v918 = vmul.f32 %v900, 0.01
    %v919 = vmax.f32 %v841, %v903
    %v920 = vmax.f32 %v844, %v904
    %v921 = vmax.f32 %v849, %v905
    %v922 = vmax.f32 %v852, %v906
    %v923 = vmax.f32 %v857, %v907
    %v924 = vmax.f32 %v860, %v908
    %v925 = vmax.f32 %v865, %v909
    %v926 = vmax.f32 %v868, %v910
    %v927 = vmax.f32 %v873, %v911
    %v928 = vmax.f32 %v876, %v912
    %v929 = vmax.f32 %v881, %v913
    %v930 = vmax.f32 %v884, %v914
    %v931 = vmax.f32 %v889, %v915
    %v932 = vmax.f32 %v892, %v916
    %v933 = vmax.f32 %v897, %v917
    %v934 = vmax.f32 %v900, %v918
    %v935 = vld [vmem:[%s5] sm:$0xf]
    %v936 = vpack.c.bf16 %v920, %v919
    %v937 = vpack.c.bf16 %v922, %v921
    %v938 = vpack.c.bf16 %v924, %v923
    %v939 = vpack.c.bf16 %v926, %v925
    %v940 = vpack.c.bf16 %v928, %v927
    %v941 = vpack.c.bf16 %v930, %v929
    %v942 = vpack.c.bf16 %v932, %v931
    %v943 = vpack.c.bf16 %v934, %v933
    %v944 = vld [vmem:[%s6] sm:$0xff]
    %946 = vset.pattern.permute.xlu0 0
    %947 = vperm.xlu0 %946, %v944
    %v948 = vpop.permute.xlu0 %947
    %950 = vmatprep.subr.bf16.mxu0 0
    %951 = vmatpush1.bf16.msra.mxu0 %v936
    %952 = vmatprep.subr.bf16.mxu0 0
    %953 = vmatpush1.bf16.msra.mxu0 %v937
    %954 = vmatprep.subr.bf16.mxu0 0
    %955 = vmatpush1.bf16.msra.mxu0 %v938
    %956 = vmatprep.subr.bf16.mxu0 0
    %957 = vmatpush1.bf16.msra.mxu0 %v939
    %958 = vmatprep.subr.bf16.mxu0 0
    %959 = vmatpush1.bf16.msra.mxu0 %v940
    %960 = vmatprep.subr.bf16.mxu0 0
    %961 = vmatpush1.bf16.msra.mxu0 %v941
    %962 = vmatprep.subr.bf16.mxu0 0
    %963 = vmatpush1.bf16.msra.mxu0 %v942
    %964 = vmatprep.subr.bf16.mxu0 0
    %965 = vmatpush1.bf16.msra.mxu0 %v943
    %966 = vmatprep.subr.bf16.mxu0 0
    %967 = vmatpush1.bf16.msra.mxu0 0
    %968 = vmatprep.subr.bf16.mxu0 0
    %969 = vmatpush1.bf16.msra.mxu0 0
    %970 = vmatprep.subr.bf16.mxu0 0
    %971 = vmatpush1.bf16.msra.mxu0 0
    %972 = vmatprep.subr.bf16.mxu0 0
    %973 = vmatpush1.bf16.msra.mxu0 0
    %974 = vmatprep.subr.bf16.mxu0 0
    %975 = vmatpush1.bf16.msra.mxu0 0
    %976 = vmatprep.subr.bf16.mxu0 0
    %977 = vmatpush1.bf16.msra.mxu0 0
    %978 = vmatprep.subr.bf16.mxu0 0
    %979 = vmatpush1.bf16.msra.mxu0 0
    %980 = vmatprep.subr.bf16.mxu0 0
    %981 = vmatpush1.bf16.msra.mxu0 0
    %982 = vmatprep.mubr.bf16.mxu0 0
    %983 = vmatmul.mubr.bf16.gmra.mrb[0].mxu0 %v935
    %v984 = vpop.f32.mrb[0].mxu0
    %v985 = vadd.f32 %v948, %v984
    %v986 = vpop.f32.mrb[0].mxu0
    %v987 = vpop.f32.mrb[0].mxu0
    %v988 = vpop.f32.mrb[0].mxu0
    %989 = vdwg.mxu0
    %990 = vst [vmem:[#allocation2] sm:$0xff] %v985
    // Predicated region
    $region30: #{mlp_forward.1} parent=1 // pred_check
      _
    $region31: #{mlp_forward.1} parent=1 // pred_check_branch
      %992 = sbr.rel (0) target = $region33
    $region32: #{mlp_forward.1} parent=1 // pred_region
      %s994 = ssub.s32 128, 128
      %995 = vsyncadd [#allocation3], %s994
      %s997 = sshll.u32 [#allocation2], 4
      %s998 = int_to_ptr.vmem [resolvable:$true] %s997
      %1000 = dma.vmem_to_hbm [thread:$0]  %s998, 128, %s7, [#allocation3]
    $region33: #{mlp_forward.1} parent=1 // pred_fallthru
      _
    // Predicated region
    $region34: #{mlp_forward.1} parent=1 // pred_check
      _
    $region35: #{mlp_forward.1} parent=1 // pred_check_branch
      %1002 = sbr.rel (0) target = $region37
    $region36: #{mlp_forward.1} parent=1 // pred_region
      %1003 = dma.done [#allocation3], 128
    $region37: #{mlp_forward.1} parent=1 // pred_fallthru
      _
    %1004 = vsyncpa [#allocation3], 1

</llo_original>
